<compile_context>
chip_gen: v7x
topology: tpu7x:2x2x1
jax: 0.10.0
libtpu: 0.0.40
codegen_flags: <defaults>
</compile_context>

<pallas_src>
import functools

import jax
import jax.numpy as jnp
from jax.experimental import pallas as pl
from jax.experimental.pallas import tpu as pltpu


def _tv_loss_kernel(x_ref, o_ref, *, weight):
    # x_ref: (TILE_BC, H, W) VMEM tile; o_ref: (TILE_BC, H-1, W-1) VMEM tile.
    xn = x_ref[...]                                   # native dtype
    h, w = xn.shape[1], xn.shape[2]

    # Neighbour shifts via XLU rolls (roll-then-upcast keeps bf16 packed):
    #   roll(x, h-1, axis=1)[:, i, :] == x[:, (i+1) % h, :]
    #   roll(x, w-1, axis=2)[:, :, j] == x[:, :, (j+1) % w]
    x_down = pltpu.roll(xn, shift=h - 1, axis=1)      # vertical neighbour
    x_right = pltpu.roll(xn, shift=w - 1, axis=2)     # horizontal neighbour

    x = xn.astype(jnp.float32)
    dh = x_down.astype(jnp.float32) - x
    dw = x_right.astype(jnp.float32) - x

    out = (2.0 * weight) * (dh * dh + dw * dw)        # (TILE_BC, H, W) f32
    # Wrap-around row H-1 and column W-1 are garbage: crop on the VMEM store
    # (start-aligned truncation -> no re-layout, just a masked narrow store).
    o_ref[...] = out[:, : h - 1, : w - 1].astype(o_ref.dtype)


def _chip_budget():
    """(target input-block bytes, scoped-VMEM cap) sized per chip generation."""
    try:
        phys = int(pltpu.get_tpu_info().vmem_capacity_bytes)
    except Exception:
        phys = 64 * 1024 * 1024                       # conservative (v7x-sized)
    if phys <= 64 * 1024 * 1024:                      # v7x: 64 MiB physical/TC
        return 4 * 1024 * 1024, 48 * 1024 * 1024
    return 8 * 1024 * 1024, 96 * 1024 * 1024          # v5e/v6e: 128 MiB physical


def _choose_tile_bc(bc, plane_bytes, target_bytes):
    """Pack planes per block near target_bytes; keep >= 2 grid steps for v7x."""
    tile = int(max(1, min(bc, target_bytes // max(plane_bytes, 1))))
    if bc >= 2:
        tile = min(tile, bc // 2)  # grid >= 2 -> "parallel" axis uses both TCs
    return max(tile, 1)


def tv_loss(x, tv_loss_weight=1.0):
    """x: (B, C, H, W) float array -> (B, C, H-1, W-1) TV map."""
    b, c, h, w = x.shape
    bc = b * c
    xf = x.reshape(bc, h, w)

    itemsize = jnp.dtype(x.dtype).itemsize
    target_bytes, vmem_cap = _chip_budget()
    tile_bc = _choose_tile_bc(bc, h * w * itemsize, target_bytes)
    grid = pl.cdiv(bc, tile_bc)  # ragged last block is safe: per-plane op

    in_block = tile_bc * h * w * itemsize
    out_block = tile_bc * (h - 1) * (w - 1) * itemsize
    tmp_f32 = tile_bc * h * w * 4                     # in-kernel f32 temporaries
    working = 2 * (in_block + out_block) + 4 * tmp_f32
    vmem_limit = int(min(vmem_cap, max(16 * 1024 * 1024, working + (2 << 20))))

    kernel = functools.partial(_tv_loss_kernel, weight=float(tv_loss_weight))

    out = pl.pallas_call(
        kernel,
        out_shape=jax.ShapeDtypeStruct((bc, h - 1, w - 1), x.dtype),
        grid=(grid,),
        in_specs=[pl.BlockSpec((tile_bc, h, w), lambda i: (i, 0, 0))],
        out_specs=pl.BlockSpec((tile_bc, h - 1, w - 1), lambda i: (i, 0, 0)),
        compiler_params=pltpu.CompilerParams(
            dimension_semantics=("parallel",),
            vmem_limit_bytes=vmem_limit,
        ),
    )(xf)

    # Metadata-only reshape: the kernel already emitted the cropped map.
    return out.reshape(b, c, h - 1, w - 1)


def _tv_loss_ref(x, tv_loss_weight=1.0):
    """Pure-JAX reference mirroring the PyTorch forward exactly."""
    h, w = x.shape[2], x.shape[3]
    h_tv = jnp.square(x[:, :, 1:, :] - x[:, :, : h - 1, :])
    w_tv = jnp.square(x[:, :, :, 1:] - x[:, :, :, : w - 1])
    return tv_loss_weight * 2 * (
        h_tv[:, :, : h - 1, : w - 1] + w_tv[:, :, : h - 1, : w - 1]
    )


if __name__ == "__main__":
    key = jax.random.PRNGKey(0)
    x = jax.random.normal(key, (2, 4, 16, 16), dtype=jnp.float32)

    out = tv_loss(x, tv_loss_weight=1.0)
    out = jax.block_until_ready(out)

    ref = _tv_loss_ref(x, tv_loss_weight=1.0)
    assert out.shape == (2, 4, 15, 15), out.shape
    assert jnp.allclose(out, ref, atol=1e-5, rtol=1e-5), (
        float(jnp.max(jnp.abs(out - ref)))
    )

    print("KERNEL_OK")
</pallas_src>

<mosaic_0001>
module attributes {stable_mosaic.version = 11 : i64} {
  func.func @_tv_loss_kernel(%arg0: i32, %arg1: memref<4x16x16xf32, #tpu.memory_space<vmem>>, %arg2: memref<4x15x15xf32, #tpu.memory_space<vmem>>) attributes {dimension_semantics = [#tpu.dimension_semantics<parallel>], iteration_bounds = array<i64: 2>, scalar_prefetch = 0 : i64, scratch_operands = 0 : i64, tpu.core_type = #tpu.core_type<tc>, window_params = [{transform_indices = @transform_0, window_bounds = array<i64: 4, 16, 16>}, {transform_indices = @transform_1, window_bounds = array<i64: 4, 15, 15>}]} {
    %c0 = arith.constant 0 : index
    %c0_0 = arith.constant 0 : index
    %c0_1 = arith.constant 0 : index
    %0 = vector.load %arg1[%c0, %c0_0, %c0_1] : memref<4x16x16xf32, #tpu.memory_space<vmem>>, vector<4x16x16xf32>
    %c15_i32 = arith.constant 15 : i32
    %1 = tpu.dynamic_rotate %0 by %c15_i32 dim 1 : vector<4x16x16xf32>, i32 -> vector<4x16x16xf32>
    %c15_i32_2 = arith.constant 15 : i32
    %2 = tpu.dynamic_rotate %0 by %c15_i32_2 dim 2 : vector<4x16x16xf32>, i32 -> vector<4x16x16xf32>
    %3 = arith.subf %1, %0 : vector<4x16x16xf32>
    %4 = arith.subf %2, %0 : vector<4x16x16xf32>
    %5 = arith.mulf %3, %3 : vector<4x16x16xf32>
    %6 = arith.mulf %4, %4 : vector<4x16x16xf32>
    %7 = arith.addf %5, %6 : vector<4x16x16xf32>
    %cst = arith.constant 2.000000e+00 : f32
    %8 = vector.broadcast %cst : f32 to vector<4x16x16xf32>
    %9 = arith.mulf %8, %7 : vector<4x16x16xf32>
    %10 = vector.extract_strided_slice %9 {offsets = [0, 0, 0], sizes = [4, 15, 15], strides = [1, 1, 1]} : vector<4x16x16xf32> to vector<4x15x15xf32>
    %c0_3 = arith.constant 0 : index
    %c0_4 = arith.constant 0 : index
    %c0_5 = arith.constant 0 : index
    %11 = vector.load %arg2[%c0_3, %c0_4, %c0_5] : memref<4x15x15xf32, #tpu.memory_space<vmem>>, vector<4x15x15xf32>
    tpu.vector_store %arg2[%c0_3, %c0_4, %c0_5], %10 {strides = array<i32>} : memref<4x15x15xf32, #tpu.memory_space<vmem>>, vector<4x15x15xf32>,
    return
  }
  func.func @transform_0(%arg0: i32) -> (i32, i32, i32) {
    %c0_i32 = arith.constant 0 : i32
    %c0_i32_0 = arith.constant 0 : i32
    %c0_i32_1 = arith.constant 0 : i32
    return %arg0, %c0_i32, %c0_i32_0 : i32, i32, i32
  }
  func.func @transform_1(%arg0: i32) -> (i32, i32, i32) {
    %c0_i32 = arith.constant 0 : i32
    %c0_i32_0 = arith.constant 0 : i32
    %c0_i32_1 = arith.constant 0 : i32
    return %arg0, %c0_i32, %c0_i32_0 : i32, i32, i32
  }
}

</mosaic_0001>

<llo_original>
// kernel: tpu_custom_call.1
$region0: #{tpu_custom_call.1}
  #allocation0 [shape = 'u32[]', space=smem, size = 0x4, offset = 0x4, fixed_abs, tag = 'smem constant byte address 0x4 - core index']
  #allocation1 [shape = 'u32[144,128]{1,0:T(1,128)}', space=vmem, size = 0x12000, scoped, tag = 'internal scratch']
  %s0 = inlined_call_operand.hbm [shape: f32[8,16,16], index: 0, kind: input, shape index: {}]
  %s1 = inlined_call_operand.vmem [shape: f32[8,15,15], index: 1, kind: output, shape index: {}]
  %s2 = sld [smem:[#allocation0]]
  $region41: #{tpu_custom_call.1} parent=0
    _
  %s4 = ssub.s32 1, %s2
  %s5 = scalar_select 0, %s4, %s2
  $region1: #{tpu_custom_call.1} parent=0
    #allocation2 [shape = 'u8[65536]{0}', space=vmem, size = 0x10000, scoped, tag = 'input window, operand 0']
    #allocation3 [shape = 's32[2]{0}', space=sflag, size = 0x8, scoped, tag = 'scoped memory for tpu_custom_call.1']
    %6 = vsyncpa [#allocation3], 0
    %s7 = scalar_lea.sflag [#allocation3], 1
    %8 = vsyncpa %s7, 0
    loop: start=0, step=1, limit=4
    $region2: #{tpu_custom_call.1} parent=1 // loop_pre_header
      _
    $region3: #{tpu_custom_call.1} parent=1 // loop_header
      %s10 = sphi 0, %s14
      %p11 = scmp.ge.s32.totalorder %s10, 4
      %s20 = sphi 0, %s22
      %s23 = sphi 0, %s20
      %s24 = sphi 0, %s23
      %s40 = sphi 0, %s24
      %s46 = sphi 0, %s48
      %s49 = sphi 0, %s46
      %s50 = sphi 0, %s49
      %s66 = sphi 0, %s50
    $region4: #{tpu_custom_call.1} parent=1 // loop_header_branch
      %13 = sbr.rel (%p11) target = $region8
    $region5: #{tpu_custom_call.1} parent=1 // loop_body
      %s15 = ssub.s32 %s10, 1
      %s16 = ssub.s32 %s10, 2
      %s17 = sadd.s32 %s10, 1
      %s18 = ssub.s32 %s10, %s17
      %p19 = scmp.eq.s32.totalorder %s18, 0
      %s21 = sadd.s32 %s20, 1
      %s22 = scalar_select %p19, %s20, %s21
      %p25 = pneg %p19
      %p26 = scmp.eq.s32.totalorder %s10, 1
      %p27 = por %p25, %p26
      %p28 = scmp.ne.s32.totalorder %s20, %s23
      %p29 = scmp.eq.s32.totalorder %s10, 0
      %p30 = por %p28, %p29
      %p31 = scmp.ne.s32.totalorder %s20, %s23
      %p32 = scmp.eq.s32.totalorder %s15, 1
      %p33 = por %p31, %p32
      %p34 = scmp.ne.s32.totalorder %s23, %s24
      %p35 = scmp.eq.s32.totalorder %s15, 0
      %p36 = por %p34, %p35
      %p37 = scmp.ne.s32.totalorder %s23, %s24
      %p38 = scmp.eq.s32.totalorder %s16, 1
      %p39 = por %p37, %p38
      %p41 = scmp.ne.s32.totalorder %s24, %s40
      %p42 = scmp.eq.s32.totalorder %s16, 0
      %p43 = por %p41, %p42
      %s44 = ssub.s32 %s10, %s17
      %p45 = scmp.eq.s32.totalorder %s44, 0
      %s47 = sadd.s32 %s46, 1
      %s48 = scalar_select %p45, %s46, %s47
      %p51 = pneg %p45
      %p52 = scmp.eq.s32.totalorder %s10, 1
      %p53 = por %p51, %p52
      %p54 = scmp.ne.s32.totalorder %s46, %s49
      %p55 = scmp.eq.s32.totalorder %s10, 0
      %p56 = por %p54, %p55
      %p57 = scmp.ne.s32.totalorder %s46, %s49
      %p58 = scmp.eq.s32.totalorder %s15, 1
      %p59 = por %p57, %p58
      %p60 = scmp.ne.s32.totalorder %s49, %s50
      %p61 = scmp.eq.s32.totalorder %s15, 0
      %p62 = por %p60, %p61
      %p63 = scmp.ne.s32.totalorder %s49, %s50
      %p64 = scmp.eq.s32.totalorder %s16, 1
      %p65 = por %p63, %p64
      %p67 = scmp.ne.s32.totalorder %s50, %s66
      %p68 = scmp.eq.s32.totalorder %s16, 0
      %p69 = por %p67, %p68
      %p70 = scmp.le.s32.totalorder 1, %s10
      %p71 = scmp.lt.s32.totalorder %s10, 3
      %p72 = pnand %p70, %p71
      %p73 = pneg %p72
      // Predicated region
      $region9: #{tpu_custom_call.1} parent=5 // pred_check
        _
      $region10: #{tpu_custom_call.1} parent=5 // pred_check_branch
        %75 = sbr.rel (%p72) target = $region12
      $region11: #{tpu_custom_call.1} parent=5 // pred_region
        %s76 = ssub.s32 %s10, 1
      $region12: #{tpu_custom_call.1} parent=5 // pred_fallthru
        _
      %p77 = scmp.lt.s32.totalorder %s10, 2
      // Predicated region
      $region13: #{tpu_custom_call.1} parent=5 // pred_check
        %p78 = pneg %p77
      $region14: #{tpu_custom_call.1} parent=5 // pred_check_branch
        %80 = sbr.rel (%p78) target = $region16
      $region15: #{tpu_custom_call.1} parent=5 // pred_region
        // Predicated region
        $region17: #{tpu_custom_call.1} parent=15 // pred_check
          %p81 = pneg %p30
        $region18: #{tpu_custom_call.1} parent=15 // pred_check_branch
          %83 = sbr.rel (%p81) target = $region20
        $region19: #{tpu_custom_call.1} parent=15 // pred_region
          %s84 = sand.u32 %s20, 1
          %s85 = scalar_lea.sflag [#allocation3], %s84
          %s86 = sand.u32 %s20, 1
          %s87 = smul.addr %s86, 64
          %s88 = scalar_lea.vmem [#allocation2], %s87
          %s89 = smul.u32 4, %s10
          %s91 = ssub.s32 1024, 1024
          %92 = vsyncadd %s85, %s91
          %s93 = smul.addr %s89, 2
          %s94 = smul.addr %s93, 128
          %s95 = scalar_lea.hbm %s0, %s94
          %s96 = sshll.u32 %s88, 4
          %s97 = int_to_ptr.vmem [resolvable:$true] %s96
          %102 = dma.hbm_to_vmem [thread:$0]  %s95, 1024, %s97, %s85, 128, 128, 8
        $region20: #{tpu_custom_call.1} parent=15 // pred_fallthru
          _
      $region16: #{tpu_custom_call.1} parent=5 // pred_fallthru
        _
      %p103 = scmp.le.s32.totalorder 1, %s10
      %p104 = scmp.lt.s32.totalorder %s10, 3
      %p105 = pnand %p103, %p104
      %p106 = pneg %p105
      // Predicated region
      $region21: #{tpu_custom_call.1} parent=5 // pred_check
        _
      $region22: #{tpu_custom_call.1} parent=5 // pred_check_branch
        %108 = sbr.rel (%p105) target = $region24
      $region23: #{tpu_custom_call.1} parent=5 // pred_region
        %s109 = ssub.s32 %s10, 1
        %s110 = sand.u32 %s23, 1
        %s111 = scalar_lea.sflag [#allocation3], %s110
        %s112 = sand.u32 %s23, 1
        %s113 = smul.addr %s112, 64
        %s114 = scalar_lea.vmem [#allocation2], %s113
        // Predicated region
        $region25: #{tpu_custom_call.1} parent=23 // pred_check
          %p115 = pneg %p36
        $region26: #{tpu_custom_call.1} parent=23 // pred_check_branch
          %117 = sbr.rel (%p115) target = $region28
        $region27: #{tpu_custom_call.1} parent=23 // pred_region
          %118 = dma.done %s111, 1024
        $region28: #{tpu_custom_call.1} parent=23 // pred_fallthru
          _
        %s119 = sand.u32 %s23, 1
        %s120 = scalar_lea.sflag [#allocation3], %s119
        %s121 = sand.u32 %s23, 1
        %s122 = smul.addr %s121, 64
        %s123 = scalar_lea.vmem [#allocation2], %s122
        %p124 = pneg %p36
        %p125 = pneg %p33
        %p126 = pneg %p62
        %p127 = pneg %p59
        %s128 = smul.u32 4, %s15
        %p129 = scmp.lt.s32.totalorder %s128, 7
        %s130 = scalar_select %p129, %s128, 7
        %s131 = smul.addr %s130, 2
        %s132 = smul.addr %s131, 8
        %s133 = scalar_lea.vmem %s1, %s132
        %s134 = smul.u32 4, %s15
        %s135 = smul.u32 4, %s15
        %p136 = scmp.lt.s32.totalorder %s135, 7
        %s137 = scalar_select %p136, %s135, 7
        %s138 = smul.addr %s137, 2
        %s139 = smul.addr %s138, 8
        %s140 = scalar_lea.vmem %s1, %s139
        %s141 = smul.u32 4, %s15
        %v142 = vld [vmem:[%s114] sm:$0xff]
        %v143 = vld [vmem:[%s114 + $0x8] sm:$0xff]
        %v144 = vld [vmem:[%s114 + $0x10] sm:$0xff]
        %v145 = vld [vmem:[%s114 + $0x18] sm:$0xff]
        %v146 = vld [vmem:[%s114 + $0x20] sm:$0xff]
        %v147 = vld [vmem:[%s114 + $0x28] sm:$0xff]
        %v148 = vld [vmem:[%s114 + $0x30] sm:$0xff]
        %v149 = vld [vmem:[%s114 + $0x38] sm:$0xff]
        %v150 = vrot.slane %v142, 1
        %v151 = vrot.slane %v144, 1
        %v152 = vrot.slane %v146, 1
        %v153 = vrot.slane %v148, 1
        %v154 = vrot.slane %v143, 1
        %v155 = vrot.slane %v145, 1
        %v156 = vrot.slane %v147, 1
        %v157 = vrot.slane %v149, 1
        %v158 = vlaneseq
        %v159 = vshrl.u32 %v158, 7
        %vm160 = vcmp.lt.s32.totalorder %v159, 7
        %v161 = vsel %vm160, %v150, %v154
        %v162 = vsel %vm160, %v151, %v155
        %v163 = vsel %vm160, %v152, %v156
        %v164 = vsel %vm160, %v153, %v157
        %v165 = vsel %vm160, %v154, %v150
        %v166 = vsel %vm160, %v155, %v151
        %v167 = vsel %vm160, %v156, %v152
        %v168 = vsel %vm160, %v157, %v153
        %vm169 = vcmask 1047680
        %170 = vrot.lane.b32.xlu0 %v142, 16
        %v171 = vpop.permute.xlu0 %170
        %v172 = vsel %vm169, %v171, %v142
        %173 = vrot.lane.b32.xlu0 %v143, 16
        %v174 = vpop.permute.xlu0 %173
        %v175 = vsel %vm169, %v174, %v143
        %176 = vrot.lane.b32.xlu0 %v144, 16
        %v177 = vpop.permute.xlu0 %176
        %v178 = vsel %vm169, %v177, %v144
        %179 = vrot.lane.b32.xlu0 %v145, 16
        %v180 = vpop.permute.xlu0 %179
        %v181 = vsel %vm169, %v180, %v145
        %182 = vrot.lane.b32.xlu0 %v146, 16
        %v183 = vpop.permute.xlu0 %182
        %v184 = vsel %vm169, %v183, %v146
        %185 = vrot.lane.b32.xlu0 %v147, 16
        %v186 = vpop.permute.xlu0 %185
        %v187 = vsel %vm169, %v186, %v147
        %188 = vrot.lane.b32.xlu0 %v148, 16
        %v189 = vpop.permute.xlu0 %188
        %v190 = vsel %vm169, %v189, %v148
        %191 = vrot.lane.b32.xlu0 %v149, 16
        %v192 = vpop.permute.xlu0 %191
        %v193 = vsel %vm169, %v192, %v149
        %194 = vrot.lane.b32.xlu0 %v172, 16
        %v195 = vpop.permute.xlu0 %194
        %196 = vrot.lane.b32.xlu0 %v175, 16
        %v197 = vpop.permute.xlu0 %196
        %198 = vrot.lane.b32.xlu0 %v178, 16
        %v199 = vpop.permute.xlu0 %198
        %200 = vrot.lane.b32.xlu0 %v181, 16
        %v201 = vpop.permute.xlu0 %200
        %202 = vrot.lane.b32.xlu0 %v184, 16
        %v203 = vpop.permute.xlu0 %202
        %204 = vrot.lane.b32.xlu0 %v187, 16
        %v205 = vpop.permute.xlu0 %204
        %206 = vrot.lane.b32.xlu0 %v190, 16
        %v207 = vpop.permute.xlu0 %206
        %208 = vrot.lane.b32.xlu0 %v193, 16
        %v209 = vpop.permute.xlu0 %208
        %v210 = vsel %vm169, %v195, %v142
        %v211 = vsel %vm169, %v197, %v143
        %v212 = vsel %vm169, %v199, %v144
        %v213 = vsel %vm169, %v201, %v145
        %v214 = vsel %vm169, %v203, %v146
        %v215 = vsel %vm169, %v205, %v147
        %v216 = vsel %vm169, %v207, %v148
        %v217 = vsel %vm169, %v209, %v149
        %v218 = vsub.f32 %v161, %v142
        %v219 = vsub.f32 %v165, %v143
        %v220 = vsub.f32 %v162, %v144
        %v221 = vsub.f32 %v166, %v145
        %v222 = vsub.f32 %v163, %v146
        %v223 = vsub.f32 %v167, %v147
        %v224 = vsub.f32 %v164, %v148
        %v225 = vsub.f32 %v168, %v149
        %234 = vrot.lane.b32.xlu0 %v142, 1
        %v235 = vpop.permute.xlu0 %234
        %236 = vrot.lane.b32.xlu0 %v143, 1
        %v237 = vpop.permute.xlu0 %236
        %238 = vrot.lane.b32.xlu0 %v144, 1
        %v239 = vpop.permute.xlu0 %238
        %240 = vrot.lane.b32.xlu0 %v145, 1
        %v241 = vpop.permute.xlu0 %240
        %242 = vrot.lane.b32.xlu0 %v146, 1
        %v243 = vpop.permute.xlu0 %242
        %244 = vrot.lane.b32.xlu0 %v147, 1
        %v245 = vpop.permute.xlu0 %244
        %246 = vrot.lane.b32.xlu0 %v148, 1
        %v247 = vpop.permute.xlu0 %246
        %248 = vrot.lane.b32.xlu0 %v149, 1
        %v249 = vpop.permute.xlu0 %248
        %v258 = vsub.f32 %v210, %v235
        %v259 = vsub.f32 %v211, %v237
        %v260 = vsub.f32 %v212, %v239
        %v261 = vsub.f32 %v213, %v241
        %v262 = vsub.f32 %v214, %v243
        %v263 = vsub.f32 %v215, %v245
        %v264 = vsub.f32 %v216, %v247
        %v265 = vsub.f32 %v217, %v249
        %v266 = vmul.f32 %v218, %v218
        %v267 = vmul.f32 %v219, %v219
        %v268 = vmul.f32 %v220, %v220
        %v269 = vmul.f32 %v221, %v221
        %v270 = vmul.f32 %v222, %v222
        %v271 = vmul.f32 %v223, %v223
        %v272 = vmul.f32 %v224, %v224
        %v273 = vmul.f32 %v225, %v225
        %v274 = vmul.f32 %v258, %v258
        %v275 = vmul.f32 %v259, %v259
        %v276 = vmul.f32 %v260, %v260
        %v277 = vmul.f32 %v261, %v261
        %v278 = vmul.f32 %v262, %v262
        %v279 = vmul.f32 %v263, %v263
        %v280 = vmul.f32 %v264, %v264
        %v281 = vmul.f32 %v265, %v265
        %290 = vrot.lane.b32.xlu0 %v274, 127
        %v291 = vpop.permute.xlu0 %290
        %292 = vrot.lane.b32.xlu0 %v275, 127
        %v293 = vpop.permute.xlu0 %292
        %294 = vrot.lane.b32.xlu0 %v276, 127
        %v295 = vpop.permute.xlu0 %294
        %296 = vrot.lane.b32.xlu0 %v277, 127
        %v297 = vpop.permute.xlu0 %296
        %298 = vrot.lane.b32.xlu0 %v278, 127
        %v299 = vpop.permute.xlu0 %298
        %300 = vrot.lane.b32.xlu0 %v279, 127
        %v301 = vpop.permute.xlu0 %300
        %302 = vrot.lane.b32.xlu0 %v280, 127
        %v303 = vpop.permute.xlu0 %302
        %304 = vrot.lane.b32.xlu0 %v281, 127
        %v305 = vpop.permute.xlu0 %304
        %v314 = vadd.f32 %v266, %v291
        %v315 = vadd.f32 %v267, %v293
        %v316 = vadd.f32 %v268, %v295
        %v317 = vadd.f32 %v269, %v297
        %v318 = vadd.f32 %v270, %v299
        %v319 = vadd.f32 %v271, %v301
        %v320 = vadd.f32 %v272, %v303
        %v321 = vadd.f32 %v273, %v305
        %v322 = vmul.f32 %v314, 2.0
        %v323 = vmul.f32 %v315, 2.0
        %v324 = vmul.f32 %v316, 2.0
        %v325 = vmul.f32 %v317, 2.0
        %v326 = vmul.f32 %v318, 2.0
        %v327 = vmul.f32 %v319, 2.0
        %v328 = vmul.f32 %v320, 2.0
        %v329 = vmul.f32 %v321, 2.0
        %vm330 = vcmask 121856
        %331 = vst.msk [vmem:[%s140] sm:$0xff] %vm330, %v322
        %vm332 = vcmask 120832
        %333 = vst.msk [vmem:[%s140 + $0x8] sm:$0x7f] %vm332, %v323
        %334 = vst.msk [vmem:[%s140 + $0x10] sm:$0xff] %vm330, %v324
        %335 = vst.msk [vmem:[%s140 + $0x18] sm:$0x7f] %vm332, %v325
        %336 = vst.msk [vmem:[%s140 + $0x20] sm:$0xff] %vm330, %v326
        %337 = vst.msk [vmem:[%s140 + $0x28] sm:$0x7f] %vm332, %v327
        %338 = vst.msk [vmem:[%s140 + $0x30] sm:$0xff] %vm330, %v328
        %339 = vst.msk [vmem:[%s140 + $0x38] sm:$0x7f] %vm332, %v329
        %s340 = smul.u32 4, %s15
        %p341 = scmp.lt.s32.totalorder %s340, 7
        %s342 = scalar_select %p341, %s340, 7
        %s343 = smul.addr %s342, 2
        %s344 = smul.addr %s343, 8
        %s345 = scalar_lea.vmem %s1, %s344
        // Predicated region
        $region29: #{tpu_custom_call.1} parent=23 // pred_check
          %p346 = pneg %p59
        $region30: #{tpu_custom_call.1} parent=23 // pred_check_branch
          %348 = sbr.rel (%p346) target = $region32
        $region31: #{tpu_custom_call.1} parent=23 // pred_region
          %s349 = smul.u32 4, %s15
        $region32: #{tpu_custom_call.1} parent=23 // pred_fallthru
          _
      $region24: #{tpu_custom_call.1} parent=5 // pred_fallthru
        _
      %p350 = scmp.le.s32.totalorder 2, %s10
      // Predicated region
      $region33: #{tpu_custom_call.1} parent=5 // pred_check
        %p351 = pneg %p350
      $region34: #{tpu_custom_call.1} parent=5 // pred_check_branch
        %353 = sbr.rel (%p351) target = $region36
      $region35: #{tpu_custom_call.1} parent=5 // pred_region
        %s354 = ssub.s32 %s10, 2
        // Predicated region
        $region37: #{tpu_custom_call.1} parent=35 // pred_check
          %p355 = pneg %p65
        $region38: #{tpu_custom_call.1} parent=35 // pred_check_branch
          %357 = sbr.rel (%p355) target = $region40
        $region39: #{tpu_custom_call.1} parent=35 // pred_region
          %s358 = smul.u32 4, %s16
          %p359 = scmp.lt.s32.totalorder %s358, 7
          %s360 = scalar_select %p359, %s358, 7
          %s361 = smul.addr %s360, 2
          %s362 = smul.addr %s361, 8
          %s363 = scalar_lea.vmem %s1, %s362
        $region40: #{tpu_custom_call.1} parent=35 // pred_fallthru
          _
      $region36: #{tpu_custom_call.1} parent=5 // pred_fallthru
        _
    $region6: #{tpu_custom_call.1} parent=1 // loop_footer
      %s14 = sadd.s32 1, %s10
    $region7: #{tpu_custom_call.1} parent=1 // loop_footer_branch
      %9 = sbr.rel target = $region3
    $region8: #{tpu_custom_call.1} parent=1 // loop_exit
      _
    %364 = vsyncpa [#allocation3], 1
    %s365 = scalar_lea.sflag [#allocation3], 1
    %366 = vsyncpa %s365, 1

</llo_original>
